<compile_context>
chip_gen: v7x
topology: tpu7x:2x2x1
jax: 0.10.0
libtpu: 0.0.40
codegen_flags: <defaults>
</compile_context>

<pallas_src>
import functools

import jax
import jax.numpy as jnp
from jax.experimental import pallas as pl
from jax.experimental.pallas import tpu as pltpu


_VMEM_LIMIT = 32 * 1024 * 1024  # OK on v5e/v6e (128 MiB phys) and v7x (64 MiB phys)


# --------------------------------------------------------------------------- #
# Kernels
# --------------------------------------------------------------------------- #
def _relpos_grid_kernel(rel_ref, q_ref, o_ref, *, bc_tile):
    # rel_ref: (K*K, D)         fused rel table, constant across the grid
    # q_ref:   (BC_TILE, D, T)  natural-layout q slab
    # o_ref:   (BC_TILE, K*K, T)
    rel = rel_ref[...]
    for c in range(bc_tile):  # small static unroll; HBM-bound, MXU has slack
        o_ref[c] = jnp.dot(
            rel, q_ref[c], preferred_element_type=jnp.float32
        ).astype(o_ref.dtype)


def _relpos_mergedn_kernel(rel_ref, q_ref, o_ref):
    # rel_ref: (K*K, D); q_ref: (D, TN); o_ref: (K*K, TN)
    o_ref[...] = jnp.dot(
        rel_ref[...], q_ref[...], preferred_element_type=jnp.float32
    ).astype(o_ref.dtype)


# --------------------------------------------------------------------------- #
# Tiling helpers (trace-time Python)
# --------------------------------------------------------------------------- #
def _divisors(n):
    ds = []
    i = 1
    while i * i <= n:
        if n % i == 0:
            ds.append(i)
            if i != n // i:
                ds.append(n // i)
        i += 1
    return sorted(ds)


def _largest_divisor_leq(n, cap, multiple_of=1):
    best = None
    for dv in _divisors(n):
        if dv <= cap and dv % multiple_of == 0:
            best = dv
    return best


# --------------------------------------------------------------------------- #
# Wrapper
# --------------------------------------------------------------------------- #
def rel_pos_emb(q, rel_height, rel_width, *, tile_n=32768,
                target_block_bytes=4 * 1024 * 1024, use_bf16=False,
                out_dtype=None):
    """q: (b, out_channels, dim_head, H, W) -> (b, out_channels, K*K, H, W)."""
    b, oc, d, h, w = q.shape
    K = rel_height.shape[0]
    assert rel_width.shape[0] == K, "pair(kernel_size) implies height == width"
    assert rel_height.shape[1] == d and rel_width.shape[1] == d
    kk = K * K
    out_dtype = q.dtype if out_dtype is None else out_dtype

    # Fused relative-embedding table (exact by distributivity).
    idx = jnp.arange(kk)
    rel_sum = rel_width[idx % K] + rel_height[idx // K]            # (K*K, d)

    bc = b * oc
    hw = h * w

    # q operand dtype.  NOTE: on the grid path a standalone f32->bf16 cast costs
    # a full extra HBM pass over q; prefer supplying bf16 q from the producer.
    q_op = q.astype(jnp.bfloat16) if use_bf16 else q
    rel_op = rel_sum.astype(q_op.dtype)
    itemsize = jnp.dtype(q_op.dtype).itemsize
    out_itemsize = jnp.dtype(out_dtype).itemsize

    # ---------------- path selection ----------------------------------------
    use_grid_path = hw >= 128
    if use_grid_path and hw % 128 != 0 and d * hw * itemsize > 2 * target_block_bytes:
        # h*w can't be lane-tiled (not a multiple of 128) and a full-row block
        # would blow the VMEM budget -> use the merged-N layout instead.
        use_grid_path = False

    if use_grid_path:
        # ---- primary path: no q transpose, no output un-transpose ----------
        q3 = q_op.reshape(bc, d, hw)                               # free reshape

        # hw tile: multiple of 128 dividing hw, else the full row.
        if hw % 128 == 0:
            cap = max(128, target_block_bytes // (d * itemsize))
            hw_tile = _largest_divisor_leq(hw, cap, multiple_of=128)
        else:
            hw_tile = hw

        # bc tile: divisor of b*oc, bounded by the block budget + unroll cap.
        cap = max(1, min(64, target_block_bytes // (d * hw_tile * itemsize)))
        bc_tile = _largest_divisor_leq(bc, cap)

        # Force >= 2 grid steps so the parallel axes can split across the two
        # TensorCores on v7x (costs nothing on v5e/v6e).
        if (bc // bc_tile) * (hw // hw_tile) < 2:
            if bc_tile > 1:
                bc_tile = _largest_divisor_leq(bc, bc_tile - 1) or 1
            if (bc // bc_tile) * (hw // hw_tile) < 2 and hw % 128 == 0 and hw_tile > 128:
                hw_tile = _largest_divisor_leq(hw, hw_tile - 1, multiple_of=128) or hw_tile

        grid = (bc // bc_tile, hw // hw_tile)
        out = pl.pallas_call(
            functools.partial(_relpos_grid_kernel, bc_tile=bc_tile),
            out_shape=jax.ShapeDtypeStruct((bc, kk, hw), out_dtype),
            grid_spec=pltpu.PrefetchScalarGridSpec(
                num_scalar_prefetch=0,
                grid=grid,
                in_specs=[
                    # Constant block index -> fetched once, not re-DMAed.
                    pl.BlockSpec((kk, d), lambda i, j: (0, 0)),
                    pl.BlockSpec((bc_tile, d, hw_tile), lambda i, j: (i, 0, j)),
                ],
                out_specs=pl.BlockSpec((bc_tile, kk, hw_tile), lambda i, j: (i, 0, j)),
            ),
            compiler_params=pltpu.CompilerParams(
                dimension_semantics=("parallel", "parallel"),
                vmem_limit_bytes=_VMEM_LIMIT,
            ),
            cost_estimate=pl.CostEstimate(
                flops=2 * kk * d * bc * hw,
                bytes_accessed=bc * d * hw * itemsize
                + bc * kk * hw * out_itemsize
                + kk * d * itemsize,
                transcendentals=0,
            ),
        )(rel_op, q3)
        return out.reshape(b, oc, kk, h, w)                        # free reshape

    # ---- fallback path: lane-dense merged-N (h*w < 128) --------------------
    n = bc * hw
    qt = jnp.transpose(q, (2, 0, 1, 3, 4)).reshape(d, n)           # (d, N)
    if use_bf16:
        qt = qt.astype(jnp.bfloat16)   # fuses with the transpose producer

    # Adaptive lane tiling: multiple of 128, >= 2 grid steps, bounded padding.
    tile_n = max(128, ((tile_n + 127) // 128) * 128)
    n128 = ((n + 127) // 128) * 128
    num_tiles = max(2, -(-n128 // tile_n))
    tn = ((-(-n // num_tiles) + 127) // 128) * 128
    n_pad = num_tiles * tn
    if n_pad != n:
        qt = jnp.pad(qt, ((0, 0), (0, n_pad - n)))

    out = pl.pallas_call(
        _relpos_mergedn_kernel,
        out_shape=jax.ShapeDtypeStruct((kk, n_pad), out_dtype),
        grid_spec=pltpu.PrefetchScalarGridSpec(
            num_scalar_prefetch=0,
            grid=(num_tiles,),
            in_specs=[
                pl.BlockSpec((kk, d), lambda i: (0, 0)),
                pl.BlockSpec((d, tn), lambda i: (0, i)),
            ],
            out_specs=pl.BlockSpec((kk, tn), lambda i: (0, i)),
        ),
        compiler_params=pltpu.CompilerParams(
            dimension_semantics=("parallel",),
            vmem_limit_bytes=_VMEM_LIMIT,
            # Let XLA fuse the transpose/pad/cast producer into the q input DMA.
            allow_input_fusion=[False, True],
        ),
        cost_estimate=pl.CostEstimate(
            flops=2 * kk * d * n_pad,
            bytes_accessed=d * n_pad * itemsize
            + kk * n_pad * out_itemsize
            + kk * d * itemsize,
            transcendentals=0,
        ),
    )(rel_op, qt)

    out = out[:, :n].reshape(kk, b, oc, h, w)
    return jnp.transpose(out, (1, 2, 0, 3, 4))


# --------------------------------------------------------------------------- #
# Pure-JAX reference: op-for-op mirror of PyTorch RelPosEmb.forward
# (permute -> einsum -> expand_dim -> permute -> view), validating the
# flattening convention independently of the kernel.
# --------------------------------------------------------------------------- #
def _reference(q, rel_height, rel_width):
    b, oc, d, h, w = q.shape
    qp = jnp.transpose(q, (0, 1, 3, 4, 2))                  # b h x y d

    def relative_logits_1d(qp_, rel_k):
        logits = jnp.einsum("bhxyd,rd->bhxyr", qp_, rel_k)   # (b, oc, x, y, r)
        k = logits.shape[4]
        return jnp.broadcast_to(logits[..., None], logits.shape + (k,))

    lw = relative_logits_1d(qp, rel_width)
    lw = jnp.transpose(lw, (0, 1, 5, 4, 2, 3)).reshape(b, oc, -1, h, w)
    lh = relative_logits_1d(qp, rel_height)
    lh = jnp.transpose(lh, (0, 1, 4, 5, 2, 3)).reshape(b, oc, -1, h, w)
    return lw + lh


if __name__ == "__main__":
    # Module config: RelPosEmb(kernel_size=3, dim_head=32)
    kernel_size = 3
    dim_head = 32
    scale = dim_head ** (-0.5)

    key = jax.random.PRNGKey(0)
    k_rh, k_rw, k_q1, k_q2, k_q3 = jax.random.split(key, 5)

    rel_height = jax.random.normal(k_rh, (kernel_size, dim_head), jnp.float32) * scale
    rel_width = jax.random.normal(k_rw, (kernel_size, dim_head), jnp.float32) * scale

    # 1) Primary (no-transpose) grid path: h*w = 256 >= 128, multiple of 128.
    b, oc, h, w = 2, 4, 16, 16
    q = jax.random.normal(k_q1, (b, oc, dim_head, h, w), jnp.float32)
    out = jax.block_until_ready(rel_pos_emb(q, rel_height, rel_width))
    ref = _reference(q, rel_height, rel_width)
    assert out.shape == (b, oc, kernel_size * kernel_size, h, w)
    assert jnp.allclose(out, ref, atol=1e-4, rtol=1e-4), float(
        jnp.max(jnp.abs(out - ref)))

    # 2) Grid path with a non-128-multiple row (full-hw lane block).
    b2, oc2, h2, w2 = 2, 4, 12, 12
    q2 = jax.random.normal(k_q2, (b2, oc2, dim_head, h2, w2), jnp.float32)
    out2 = jax.block_until_ready(rel_pos_emb(q2, rel_height, rel_width))
    ref2 = _reference(q2, rel_height, rel_width)
    assert jnp.allclose(out2, ref2, atol=1e-4, rtol=1e-4), float(
        jnp.max(jnp.abs(out2 - ref2)))

    # 3) Fallback merged-N path: h*w = 64 < 128.
    b3, oc3, h3, w3 = 2, 4, 8, 8
    q3 = jax.random.normal(k_q3, (b3, oc3, dim_head, h3, w3), jnp.float32)
    out3 = jax.block_until_ready(rel_pos_emb(q3, rel_height, rel_width))
    ref3 = _reference(q3, rel_height, rel_width)
    assert jnp.allclose(out3, ref3, atol=1e-4, rtol=1e-4), float(
        jnp.max(jnp.abs(out3 - ref3)))

    # 4) bf16-operand path, looser tolerance (f32 accumulation).
    out4 = jax.block_until_ready(
        rel_pos_emb(q3, rel_height, rel_width, use_bf16=True))
    assert jnp.allclose(out4, ref3, atol=5e-2, rtol=5e-2), float(
        jnp.max(jnp.abs(out4 - ref3)))

    print("KERNEL_OK")
</pallas_src>

<mosaic_0001>
module attributes {stable_mosaic.version = 11 : i64} {
  func.func @_relpos_grid_kernel(%arg0: i32, %arg1: i32, %arg2: memref<9x32xf32, #tpu.memory_space<vmem>>, %arg3: memref<4x32x256xf32, #tpu.memory_space<vmem>>, %arg4: memref<4x9x256xf32, #tpu.memory_space<vmem>>) attributes {dimension_semantics = [#tpu.dimension_semantics<parallel>, #tpu.dimension_semantics<parallel>], iteration_bounds = array<i64: 2, 1>, scalar_prefetch = 0 : i64, scratch_operands = 0 : i64, tpu.core_type = #tpu.core_type<tc>, window_params = [{pipeline_mode = #tpu.pipeline_mode<synchronous>, transform_indices = @transform_0, window_bounds = array<i64: 9, 32>}, {transform_indices = @transform_1, window_bounds = array<i64: 4, 32, 256>}, {transform_indices = @transform_2, window_bounds = array<i64: 4, 9, 256>}]} {
    %c0 = arith.constant 0 : index
    %c0_0 = arith.constant 0 : index
    %0 = vector.load %arg2[%c0, %c0_0] : memref<9x32xf32, #tpu.memory_space<vmem>>, vector<9x32xf32>
    %c0_1 = arith.constant 0 : index
    %c0_2 = arith.constant 0 : index
    %c0_3 = arith.constant 0 : index
    %1 = vector.load %arg3[%c0_1, %c0_2, %c0_3] : memref<4x32x256xf32, #tpu.memory_space<vmem>>, vector<1x32x256xf32>
    %2 = vector.shape_cast %1 : vector<1x32x256xf32> to vector<32x256xf32>
    %cst = arith.constant dense<0.000000e+00> : vector<9x256xf32>
    %3 = tpu.matmul %0, %2, %cst {dimension_numbers = #tpu.dot_dimension_numbers<[1], [0], [0], [1], [0, 0, 1, 1], [], []>} : vector<9x32xf32>, vector<32x256xf32>, vector<9x256xf32> -> vector<9x256xf32>
    %c0_4 = arith.constant 0 : index
    %c0_5 = arith.constant 0 : index
    %c0_6 = arith.constant 0 : index
    %4 = vector.load %arg4[%c0_4, %c0_5, %c0_6] : memref<4x9x256xf32, #tpu.memory_space<vmem>>, vector<1x9x256xf32>
    %5 = vector.shape_cast %4 : vector<1x9x256xf32> to vector<9x256xf32>
    %6 = vector.shape_cast %3 : vector<9x256xf32> to vector<1x9x256xf32>
    tpu.vector_store %arg4[%c0_4, %c0_5, %c0_6], %6 {strides = array<i32>} : memref<4x9x256xf32, #tpu.memory_space<vmem>>, vector<1x9x256xf32>,
    %c1 = arith.constant 1 : index
    %c0_7 = arith.constant 0 : index
    %c0_8 = arith.constant 0 : index
    %7 = vector.load %arg3[%c1, %c0_7, %c0_8] : memref<4x32x256xf32, #tpu.memory_space<vmem>>, vector<1x32x256xf32>
    %8 = vector.shape_cast %7 : vector<1x32x256xf32> to vector<32x256xf32>
    %cst_9 = arith.constant dense<0.000000e+00> : vector<9x256xf32>
    %9 = tpu.matmul %0, %8, %cst_9 {dimension_numbers = #tpu.dot_dimension_numbers<[1], [0], [0], [1], [0, 0, 1, 1], [], []>} : vector<9x32xf32>, vector<32x256xf32>, vector<9x256xf32> -> vector<9x256xf32>
    %c1_10 = arith.constant 1 : index
    %c0_11 = arith.constant 0 : index
    %c0_12 = arith.constant 0 : index
    %10 = vector.load %arg4[%c1_10, %c0_11, %c0_12] : memref<4x9x256xf32, #tpu.memory_space<vmem>>, vector<1x9x256xf32>
    %11 = vector.shape_cast %10 : vector<1x9x256xf32> to vector<9x256xf32>
    %12 = vector.shape_cast %9 : vector<9x256xf32> to vector<1x9x256xf32>
    tpu.vector_store %arg4[%c1_10, %c0_11, %c0_12], %12 {strides = array<i32>} : memref<4x9x256xf32, #tpu.memory_space<vmem>>, vector<1x9x256xf32>,
    %c2 = arith.constant 2 : index
    %c0_13 = arith.constant 0 : index
    %c0_14 = arith.constant 0 : index
    %13 = vector.load %arg3[%c2, %c0_13, %c0_14] : memref<4x32x256xf32, #tpu.memory_space<vmem>>, vector<1x32x256xf32>
    %14 = vector.shape_cast %13 : vector<1x32x256xf32> to vector<32x256xf32>
    %cst_15 = arith.constant dense<0.000000e+00> : vector<9x256xf32>
    %15 = tpu.matmul %0, %14, %cst_15 {dimension_numbers = #tpu.dot_dimension_numbers<[1], [0], [0], [1], [0, 0, 1, 1], [], []>} : vector<9x32xf32>, vector<32x256xf32>, vector<9x256xf32> -> vector<9x256xf32>
    %c2_16 = arith.constant 2 : index
    %c0_17 = arith.constant 0 : index
    %c0_18 = arith.constant 0 : index
    %16 = vector.load %arg4[%c2_16, %c0_17, %c0_18] : memref<4x9x256xf32, #tpu.memory_space<vmem>>, vector<1x9x256xf32>
    %17 = vector.shape_cast %16 : vector<1x9x256xf32> to vector<9x256xf32>
    %18 = vector.shape_cast %15 : vector<9x256xf32> to vector<1x9x256xf32>
    tpu.vector_store %arg4[%c2_16, %c0_17, %c0_18], %18 {strides = array<i32>} : memref<4x9x256xf32, #tpu.memory_space<vmem>>, vector<1x9x256xf32>,
    %c3 = arith.constant 3 : index
    %c0_19 = arith.constant 0 : index
    %c0_20 = arith.constant 0 : index
    %19 = vector.load %arg3[%c3, %c0_19, %c0_20] : memref<4x32x256xf32, #tpu.memory_space<vmem>>, vector<1x32x256xf32>
    %20 = vector.shape_cast %19 : vector<1x32x256xf32> to vector<32x256xf32>
    %cst_21 = arith.constant dense<0.000000e+00> : vector<9x256xf32>
    %21 = tpu.matmul %0, %20, %cst_21 {dimension_numbers = #tpu.dot_dimension_numbers<[1], [0], [0], [1], [0, 0, 1, 1], [], []>} : vector<9x32xf32>, vector<32x256xf32>, vector<9x256xf32> -> vector<9x256xf32>
    %c3_22 = arith.constant 3 : index
    %c0_23 = arith.constant 0 : index
    %c0_24 = arith.constant 0 : index
    %22 = vector.load %arg4[%c3_22, %c0_23, %c0_24] : memref<4x9x256xf32, #tpu.memory_space<vmem>>, vector<1x9x256xf32>
    %23 = vector.shape_cast %22 : vector<1x9x256xf32> to vector<9x256xf32>
    %24 = vector.shape_cast %21 : vector<9x256xf32> to vector<1x9x256xf32>
    tpu.vector_store %arg4[%c3_22, %c0_23, %c0_24], %24 {strides = array<i32>} : memref<4x9x256xf32, #tpu.memory_space<vmem>>, vector<1x9x256xf32>,
    return
  }
  func.func @transform_0(%arg0: i32, %arg1: i32) -> (i32, i32) {
    %c0_i32 = arith.constant 0 : i32
    %c0_i32_0 = arith.constant 0 : i32
    %c0_i32_1 = arith.constant 0 : i32
    return %c0_i32, %c0_i32_0 : i32, i32
  }
  func.func @transform_1(%arg0: i32, %arg1: i32) -> (i32, i32, i32) {
    %c0_i32 = arith.constant 0 : i32
    %c0_i32_0 = arith.constant 0 : i32
    return %arg0, %c0_i32, %arg1 : i32, i32, i32
  }
  func.func @transform_2(%arg0: i32, %arg1: i32) -> (i32, i32, i32) {
    %c0_i32 = arith.constant 0 : i32
    %c0_i32_0 = arith.constant 0 : i32
    return %arg0, %c0_i32, %arg1 : i32, i32, i32
  }
}

</mosaic_0001>

<llo_original>
// kernel: tpu_custom_call.1
$region0: #{tpu_custom_call.1}
  #allocation0 [shape = 'u32[]', space=smem, size = 0x4, offset = 0x4, fixed_abs, tag = 'smem constant byte address 0x4 - core index']
  #allocation1 [shape = 'u32[144,128]{1,0:T(1,128)}', space=vmem, size = 0x12000, scoped, tag = 'internal scratch']
  %s0 = inlined_call_operand.hbm [shape: f32[9,32], index: 0, kind: input, shape index: {}]
  %s1 = inlined_call_operand.hbm [shape: f32[8,32,256], index: 1, kind: input, shape index: {}]
  %s2 = inlined_call_operand.vmem [shape: f32[8,9,256], index: 2, kind: output, shape index: {}]
  %s3 = sld [smem:[#allocation0]]
  $region49: #{tpu_custom_call.1} parent=0
    _
  %s5 = ssub.s32 1, %s3
  %s6 = scalar_select 0, %s5, %s3
  $region1: #{tpu_custom_call.1} parent=0
    #allocation2 [shape = 'u8[8192]{0}', space=vmem, size = 0x2000, scoped, tag = 'input window, operand 0, single buffered']
    #allocation3 [shape = 's32[2]{0}', space=sflag, size = 0x8, scoped, tag = 'scoped memory for tpu_custom_call.1']
    #allocation4 [shape = 'u8[262144]{0}', space=vmem, size = 0x40000, scoped, tag = 'input window, operand 1']
    #allocation5 [shape = 's32[2]{0}', space=sflag, size = 0x8, scoped, tag = 'scoped memory for tpu_custom_call.1']
    %7 = vsyncpa [#allocation3], 0
    %8 = vsyncpa [#allocation5], 0
    %s9 = scalar_lea.sflag [#allocation5], 1
    %10 = vsyncpa %s9, 0
    loop: start=0, step=1, limit=4
    $region2: #{tpu_custom_call.1} parent=1 // loop_pre_header
      _
    $region3: #{tpu_custom_call.1} parent=1 // loop_header
      %s12 = sphi 0, %s16
      %p13 = scmp.ge.s32.totalorder %s12, 4
      %s19 = sphi 0, %s31
      %s20 = sphi 0, %s27
      %s21 = sphi 0, %s19
      %s22 = sphi 0, %s20
      %s23 = sphi 0, %s21
      %s24 = sphi 0, %s22
      %s32 = sphi 0, %s32
      %s34 = sphi 0, %s32
      %s35 = sphi 0, %s34
      %s49 = sphi 0, %s35
      %s57 = sphi 0, %s59
      %s60 = sphi 0, %s57
      %s61 = sphi 0, %s60
      %s77 = sphi 0, %s61
      %s85 = sphi 0, %s87
      %s88 = sphi 0, %s85
      %s89 = sphi 0, %s88
      %s105 = sphi 0, %s89
    $region4: #{tpu_custom_call.1} parent=1 // loop_header_branch
      %15 = sbr.rel (%p13) target = $region8
    $region5: #{tpu_custom_call.1} parent=1 // loop_body
      %s17 = ssub.s32 %s12, 1
      %s18 = ssub.s32 %s12, 2
      %s25 = sadd.s32 1, %s20
      %p26 = scmp.ge.s32.totalorder %s25, 1
      %s27 = scalar_select %p26, 0, %s25
      %s28 = sadd.s32 1, %s19
      %s29 = scalar_select %p26, %s28, %s19
      %p30 = scmp.ge.s32.totalorder %s29, 2
      %s31 = scalar_select %p30, 0, %s29
      %s33 = sadd.s32 %s32, 1
      %p36 = scmp.eq.s32.totalorder %s12, 1
      %p37 = scmp.ne.s32.totalorder %s32, %s34
      %p38 = scmp.eq.s32.totalorder %s12, 0
      %p39 = por %p37, %p38
      %p40 = scmp.ne.s32.totalorder %s32, %s34
      %p41 = scmp.eq.s32.totalorder %s17, 1
      %p42 = por %p40, %p41
      %p43 = scmp.ne.s32.totalorder %s34, %s35
      %p44 = scmp.eq.s32.totalorder %s17, 0
      %p45 = por %p43, %p44
      %p46 = scmp.ne.s32.totalorder %s34, %s35
      %p47 = scmp.eq.s32.totalorder %s18, 1
      %p48 = por %p46, %p47
      %p50 = scmp.ne.s32.totalorder %s35, %s49
      %p51 = scmp.eq.s32.totalorder %s18, 0
      %p52 = por %p50, %p51
      %s53 = ssub.s32 %s19, %s31
      %s54 = ssub.s32 %s20, %s27
      %s55 = sor.u32 %s53, %s54
      %p56 = scmp.eq.s32.totalorder %s55, 0
      %s58 = sadd.s32 %s57, 1
      %s59 = scalar_select %p56, %s57, %s58
      %p62 = pneg %p56
      %p63 = scmp.eq.s32.totalorder %s12, 1
      %p64 = por %p62, %p63
      %p65 = scmp.ne.s32.totalorder %s57, %s60
      %p66 = scmp.eq.s32.totalorder %s12, 0
      %p67 = por %p65, %p66
      %p68 = scmp.ne.s32.totalorder %s57, %s60
      %p69 = scmp.eq.s32.totalorder %s17, 1
      %p70 = por %p68, %p69
      %p71 = scmp.ne.s32.totalorder %s60, %s61
      %p72 = scmp.eq.s32.totalorder %s17, 0
      %p73 = por %p71, %p72
      %p74 = scmp.ne.s32.totalorder %s60, %s61
      %p75 = scmp.eq.s32.totalorder %s18, 1
      %p76 = por %p74, %p75
      %p78 = scmp.ne.s32.totalorder %s61, %s77
      %p79 = scmp.eq.s32.totalorder %s18, 0
      %p80 = por %p78, %p79
      %s81 = ssub.s32 %s19, %s31
      %s82 = ssub.s32 %s20, %s27
      %s83 = sor.u32 %s81, %s82
      %p84 = scmp.eq.s32.totalorder %s83, 0
      %s86 = sadd.s32 %s85, 1
      %s87 = scalar_select %p84, %s85, %s86
      %p90 = pneg %p84
      %p91 = scmp.eq.s32.totalorder %s12, 1
      %p92 = por %p90, %p91
      %p93 = scmp.ne.s32.totalorder %s85, %s88
      %p94 = scmp.eq.s32.totalorder %s12, 0
      %p95 = por %p93, %p94
      %p96 = scmp.ne.s32.totalorder %s85, %s88
      %p97 = scmp.eq.s32.totalorder %s17, 1
      %p98 = por %p96, %p97
      %p99 = scmp.ne.s32.totalorder %s88, %s89
      %p100 = scmp.eq.s32.totalorder %s17, 0
      %p101 = por %p99, %p100
      %p102 = scmp.ne.s32.totalorder %s88, %s89
      %p103 = scmp.eq.s32.totalorder %s18, 1
      %p104 = por %p102, %p103
      %p106 = scmp.ne.s32.totalorder %s89, %s105
      %p107 = scmp.eq.s32.totalorder %s18, 0
      %p108 = por %p106, %p107
      %p109 = scmp.le.s32.totalorder 1, %s12
      %p110 = scmp.lt.s32.totalorder %s12, 3
      %p111 = pnand %p109, %p110
      %p112 = pneg %p111
      // Predicated region
      $region9: #{tpu_custom_call.1} parent=5 // pred_check
        _
      $region10: #{tpu_custom_call.1} parent=5 // pred_check_branch
        %114 = sbr.rel (%p111) target = $region12
      $region11: #{tpu_custom_call.1} parent=5 // pred_region
        %s115 = ssub.s32 %s12, 1
        // Predicated region
        $region13: #{tpu_custom_call.1} parent=11 // pred_check
          %p116 = pneg %p45
        $region14: #{tpu_custom_call.1} parent=11 // pred_check_branch
          %118 = sbr.rel (%p116) target = $region16
        $region15: #{tpu_custom_call.1} parent=11 // pred_region
          %s120 = ssub.s32 256, 256
          %121 = vsyncadd [#allocation3], %s120
          %s122 = sshll.u32 [#allocation2], 4
          %s123 = int_to_ptr.vmem [resolvable:$true] %s122
          %128 = dma.hbm_to_vmem [thread:$0]  %s0, 256, %s123, [#allocation3], 128, 128, 8
        $region16: #{tpu_custom_call.1} parent=11 // pred_fallthru
          _
      $region12: #{tpu_custom_call.1} parent=5 // pred_fallthru
        _
      %p129 = scmp.lt.s32.totalorder %s12, 2
      // Predicated region
      $region17: #{tpu_custom_call.1} parent=5 // pred_check
        %p130 = pneg %p129
      $region18: #{tpu_custom_call.1} parent=5 // pred_check_branch
        %132 = sbr.rel (%p130) target = $region20
      $region19: #{tpu_custom_call.1} parent=5 // pred_region
        // Predicated region
        $region21: #{tpu_custom_call.1} parent=19 // pred_check
          %p133 = pneg %p67
        $region22: #{tpu_custom_call.1} parent=19 // pred_check_branch
          %135 = sbr.rel (%p133) target = $region24
        $region23: #{tpu_custom_call.1} parent=19 // pred_region
          %s136 = sand.u32 %s57, 1
          %s137 = scalar_lea.sflag [#allocation5], %s136
          %s138 = sand.u32 %s57, 1
          %s139 = smul.addr %s138, 256
          %s140 = scalar_lea.vmem [#allocation4], %s139
          %s141 = smul.u32 4, %s19
          %s142 = smul.u32 2, %s20
          %s144 = ssub.s32 4096, 4096
          %145 = vsyncadd %s137, %s144
          %s146 = smul.addr %s141, 8
          %s147 = sadd.s32 %s142, %s146
          %s148 = smul.addr %s147, 128
          %s149 = scalar_lea.hbm %s1, %s148
          %s150 = sshll.u32 %s140, 4
          %s151 = int_to_ptr.vmem [resolvable:$true] %s150
          %156 = dma.hbm_to_vmem [thread:$0]  %s149, 4096, %s151, %s137, 256, 256, 16
        $region24: #{tpu_custom_call.1} parent=19 // pred_fallthru
          _
      $region20: #{tpu_custom_call.1} parent=5 // pred_fallthru
        _
      %p157 = scmp.le.s32.totalorder 1, %s12
      %p158 = scmp.lt.s32.totalorder %s12, 3
      %p159 = pnand %p157, %p158
      %p160 = pneg %p159
      // Predicated region
      $region25: #{tpu_custom_call.1} parent=5 // pred_check
        _
      $region26: #{tpu_custom_call.1} parent=5 // pred_check_branch
        %162 = sbr.rel (%p159) target = $region28
      $region27: #{tpu_custom_call.1} parent=5 // pred_region
        %s163 = ssub.s32 %s12, 1
        // Predicated region
        $region29: #{tpu_custom_call.1} parent=27 // pred_check
          %p164 = pneg %p45
        $region30: #{tpu_custom_call.1} parent=27 // pred_check_branch
          %166 = sbr.rel (%p164) target = $region32
        $region31: #{tpu_custom_call.1} parent=27 // pred_region
          %167 = dma.done [#allocation3], 256
        $region32: #{tpu_custom_call.1} parent=27 // pred_fallthru
          _
        %s168 = sand.u32 %s60, 1
        %s169 = scalar_lea.sflag [#allocation5], %s168
        %s170 = sand.u32 %s60, 1
        %s171 = smul.addr %s170, 256
        %s172 = scalar_lea.vmem [#allocation4], %s171
        // Predicated region
        $region33: #{tpu_custom_call.1} parent=27 // pred_check
          %p173 = pneg %p73
        $region34: #{tpu_custom_call.1} parent=27 // pred_check_branch
          %175 = sbr.rel (%p173) target = $region36
        $region35: #{tpu_custom_call.1} parent=27 // pred_region
          %176 = dma.done %s169, 4096
        $region36: #{tpu_custom_call.1} parent=27 // pred_fallthru
          _
        %p177 = pneg %p45
        %p178 = pneg %p42
        %s179 = sand.u32 %s60, 1
        %s180 = scalar_lea.sflag [#allocation5], %s179
        %s181 = sand.u32 %s60, 1
        %s182 = smul.addr %s181, 256
        %s183 = scalar_lea.vmem [#allocation4], %s182
        %p184 = pneg %p73
        %p185 = pneg %p70
        %p186 = pneg %p101
        %p187 = pneg %p98
        %s188 = smul.u32 4, %s21
        %s189 = smul.u32 2, %s22
        %p190 = scmp.lt.s32.totalorder %s188, 7
        %s191 = scalar_select %p190, %s188, 7
        %p192 = scmp.lt.s32.totalorder %s189, 1
        %s193 = scalar_select %p192, %s189, 1
        %s194 = smul.addr %s191, 4
        %s195 = sadd.s32 %s193, %s194
        %s196 = smul.addr %s195, 8
        %s197 = scalar_lea.vmem %s2, %s196
        %s198 = smul.u32 4, %s21
        %s199 = smul.u32 2, %s22
        %s200 = smul.u32 4, %s21
        %s201 = smul.u32 2, %s22
        %p202 = scmp.lt.s32.totalorder %s200, 7
        %s203 = scalar_select %p202, %s200, 7
        %p204 = scmp.lt.s32.totalorder %s201, 1
        %s205 = scalar_select %p204, %s201, 1
        %s206 = smul.addr %s203, 4
        %s207 = sadd.s32 %s205, %s206
        %s208 = smul.addr %s207, 8
        %s209 = scalar_lea.vmem %s2, %s208
        %s210 = smul.u32 4, %s21
        %s211 = smul.u32 2, %s22
        %v212 = vld [vmem:[#allocation2] sm:$0xff]
        %v213 = vld [vmem:[#allocation2 + $0x8] sm:$0x1]
        %v214 = vld [vmem:[%s172] sm:$0xff]
        %v215 = vld [vmem:[%s172 + $0x8] sm:$0xff]
        %v216 = vld [vmem:[%s172 + $0x10] sm:$0xff]
        %v217 = vld [vmem:[%s172 + $0x18] sm:$0xff]
        %v218 = vld [vmem:[%s172 + $0x20] sm:$0xff]
        %v219 = vld [vmem:[%s172 + $0x28] sm:$0xff]
        %v220 = vld [vmem:[%s172 + $0x30] sm:$0xff]
        %v221 = vld [vmem:[%s172 + $0x38] sm:$0xff]
        %vm222 = vcmask 261120
        %v224 = vsel %vm222, %v212, 0
        %v227 = vsel %vm222, %v213, 0
        %229 = vmatprep.subr.mxu0 %v215
        %230 = vmatpush1.msra.mxu0 %v214
        %231 = vmatprep.subr.mxu0 %v217
        %232 = vmatpush1.msra.mxu0 %v216
        %233 = vmatprep.subr.mxu0 %v219
        %234 = vmatpush1.msra.mxu0 %v218
        %235 = vmatprep.subr.mxu0 %v221
        %236 = vmatpush1.msra.mxu0 %v220
        %237 = vmatprep.subr.mxu0 0.0
        %238 = vmatpush1.msra.mxu0 0.0
        %239 = vmatprep.subr.mxu0 0.0
        %240 = vmatpush1.msra.mxu0 0.0
        %241 = vmatprep.subr.mxu0 0.0
        %242 = vmatpush1.msra.mxu0 0.0
        %243 = vmatprep.subr.mxu0 0.0
        %244 = vmatpush1.msra.mxu0 0.0
        %245 = vmatprep.subr.mxu0 0.0
        %246 = vmatpush1.msra.mxu0 0.0
        %247 = vmatprep.subr.mxu0 0.0
        %248 = vmatpush1.msra.mxu0 0.0
        %249 = vmatprep.subr.mxu0 0.0
        %250 = vmatpush1.msra.mxu0 0.0
        %251 = vmatprep.subr.mxu0 0.0
        %252 = vmatpush1.msra.mxu0 0.0
        %253 = vmatprep.subr.mxu0 0.0
        %254 = vmatpush1.msra.mxu0 0.0
        %255 = vmatprep.subr.mxu0 0.0
        %256 = vmatpush1.msra.mxu0 0.0
        %257 = vmatprep.subr.mxu0 0.0
        %258 = vmatpush1.msra.mxu0 0.0
        %259 = vmatprep.subr.mxu0 0.0
        %260 = vmatpush1.msra.mxu0 0.0
        %261 = vmatprep.subr.mxu0 0.0
        %262 = vmatpush1.msra.mxu0 0.0
        %263 = vmatprep.subr.mxu0 0.0
        %264 = vmatpush1.msra.mxu0 0.0
        %265 = vmatprep.subr.mxu0 0.0
        %266 = vmatpush1.msra.mxu0 0.0
        %267 = vmatprep.subr.mxu0 0.0
        %268 = vmatpush1.msra.mxu0 0.0
        %269 = vmatprep.subr.mxu0 0.0
        %270 = vmatpush1.msra.mxu0 0.0
        %271 = vmatprep.subr.mxu0 0.0
        %272 = vmatpush1.msra.mxu0 0.0
        %273 = vmatprep.subr.mxu0 0.0
        %274 = vmatpush1.msra.mxu0 0.0
        %275 = vmatprep.subr.mxu0 0.0
        %276 = vmatpush1.msra.mxu0 0.0
        %277 = vmatprep.subr.mxu0 0.0
        %278 = vmatpush1.msra.mxu0 0.0
        %279 = vmatprep.subr.mxu0 0.0
        %280 = vmatpush1.msra.mxu0 0.0
        %281 = vmatprep.subr.mxu0 0.0
        %282 = vmatpush1.msra.mxu0 0.0
        %283 = vmatprep.subr.mxu0 0.0
        %284 = vmatpush1.msra.mxu0 0.0
        %285 = vmatprep.subr.mxu0 0.0
        %286 = vmatpush1.msra.mxu0 0.0
        %287 = vmatprep.subr.mxu0 0.0
        %288 = vmatpush1.msra.mxu0 0.0
        %289 = vmatprep.subr.mxu0 0.0
        %290 = vmatpush1.msra.mxu0 0.0
        %291 = vmatprep.subr.mxu0 0.0
        %292 = vmatpush1.msra.mxu0 0.0
        %293 = vmatprep.mubr.f32.mxu0 0.0
        %294 = vmatmul.mubr.f32.gmra.mrb[0].mxu0 %v224
        %v295 = vpop.f32.mrb[0].mxu0
        %v296 = vadd.f32 0.0, %v295
        %v297 = vpop.f32.mrb[0].mxu0
        %v298 = vadd.f32 0.0, %v297
        %299 = vmatprep.mubr.f32.mxu0 0.0
        %300 = vmatmul.mubr.f32.gmra.mrb[0].mxu0 %v227
        %v301 = vpop.f32.mrb[0].mxu0
        %v302 = vadd.f32 0.0, %v301
        %v303 = vpop.f32.mrb[0].mxu0
        %v304 = vadd.f32 0.0, %v303
        %305 = vdwg.mxu0
        %306 = vst [vmem:[%s209] sm:$0xff] %v296
        %307 = vst [vmem:[%s209 + $0x8] sm:$0xff] %v298
        %308 = vst [vmem:[%s209 + $0x10] sm:$0x1] %v302
        %309 = vst [vmem:[%s209 + $0x18] sm:$0x1] %v304
        %s310 = scalar_lea.vmem %s172, 64 [#allocation4]
        %v311 = vld [vmem:[%s310] sm:$0xff]
        %v312 = vld [vmem:[%s310 + $0x8] sm:$0xff]
        %v313 = vld [vmem:[%s310 + $0x10] sm:$0xff]
        %v314 = vld [vmem:[%s310 + $0x18] sm:$0xff]
        %v315 = vld [vmem:[%s310 + $0x20] sm:$0xff]
        %v316 = vld [vmem:[%s310 + $0x28] sm:$0xff]
        %v317 = vld [vmem:[%s310 + $0x30] sm:$0xff]
        %v318 = vld [vmem:[%s310 + $0x38] sm:$0xff]
        %319 = vmatprep.subr.mxu0 %v312
        %320 = vmatpush1.msra.mxu0 %v311
        %321 = vmatprep.subr.mxu0 %v314
        %322 = vmatpush1.msra.mxu0 %v313
        %323 = vmatprep.subr.mxu0 %v316
        %324 = vmatpush1.msra.mxu0 %v315
        %325 = vmatprep.subr.mxu0 %v318
        %326 = vmatpush1.msra.mxu0 %v317
        %327 = vmatprep.subr.mxu0 0.0
        %328 = vmatpush1.msra.mxu0 0.0
        %329 = vmatprep.subr.mxu0 0.0
        %330 = vmatpush1.msra.mxu0 0.0
        %331 = vmatprep.subr.mxu0 0.0
        %332 = vmatpush1.msra.mxu0 0.0
        %333 = vmatprep.subr.mxu0 0.0
        %334 = vmatpush1.msra.mxu0 0.0
        %335 = vmatprep.subr.mxu0 0.0
        %336 = vmatpush1.msra.mxu0 0.0
        %337 = vmatprep.subr.mxu0 0.0
        %338 = vmatpush1.msra.mxu0 0.0
        %339 = vmatprep.subr.mxu0 0.0
        %340 = vmatpush1.msra.mxu0 0.0
        %341 = vmatprep.subr.mxu0 0.0
        %342 = vmatpush1.msra.mxu0 0.0
        %343 = vmatprep.subr.mxu0 0.0
        %344 = vmatpush1.msra.mxu0 0.0
        %345 = vmatprep.subr.mxu0 0.0
        %346 = vmatpush1.msra.mxu0 0.0
        %347 = vmatprep.subr.mxu0 0.0
        %348 = vmatpush1.msra.mxu0 0.0
        %349 = vmatprep.subr.mxu0 0.0
        %350 = vmatpush1.msra.mxu0 0.0
        %351 = vmatprep.subr.mxu0 0.0
        %352 = vmatpush1.msra.mxu0 0.0
        %353 = vmatprep.subr.mxu0 0.0
        %354 = vmatpush1.msra.mxu0 0.0
        %355 = vmatprep.subr.mxu0 0.0
        %356 = vmatpush1.msra.mxu0 0.0
        %357 = vmatprep.subr.mxu0 0.0
        %358 = vmatpush1.msra.mxu0 0.0
        %359 = vmatprep.subr.mxu0 0.0
        %360 = vmatpush1.msra.mxu0 0.0
        %361 = vmatprep.subr.mxu0 0.0
        %362 = vmatpush1.msra.mxu0 0.0
        %363 = vmatprep.subr.mxu0 0.0
        %364 = vmatpush1.msra.mxu0 0.0
        %365 = vmatprep.subr.mxu0 0.0
        %366 = vmatpush1.msra.mxu0 0.0
        %367 = vmatprep.subr.mxu0 0.0
        %368 = vmatpush1.msra.mxu0 0.0
        %369 = vmatprep.subr.mxu0 0.0
        %370 = vmatpush1.msra.mxu0 0.0
        %371 = vmatprep.subr.mxu0 0.0
        %372 = vmatpush1.msra.mxu0 0.0
        %373 = vmatprep.subr.mxu0 0.0
        %374 = vmatpush1.msra.mxu0 0.0
        %375 = vmatprep.subr.mxu0 0.0
        %376 = vmatpush1.msra.mxu0 0.0
        %377 = vmatprep.subr.mxu0 0.0
        %378 = vmatpush1.msra.mxu0 0.0
        %379 = vmatprep.subr.mxu0 0.0
        %380 = vmatpush1.msra.mxu0 0.0
        %381 = vmatprep.subr.mxu0 0.0
        %382 = vmatpush1.msra.mxu0 0.0
        %383 = vmatprep.mubr.f32.mxu0 0.0
        %384 = vmatmul.mubr.f32.gmra.mrb[0].mxu0 %v224
        %v385 = vpop.f32.mrb[0].mxu0
        %v386 = vadd.f32 0.0, %v385
        %v387 = vpop.f32.mrb[0].mxu0
        %v388 = vadd.f32 0.0, %v387
        %389 = vmatprep.mubr.f32.mxu0 0.0
        %390 = vmatmul.mubr.f32.gmra.mrb[0].mxu0 %v227
        %v391 = vpop.f32.mrb[0].mxu0
        %v392 = vadd.f32 0.0, %v391
        %v393 = vpop.f32.mrb[0].mxu0
        %v394 = vadd.f32 0.0, %v393
        %395 = vdwg.mxu0
        %s396 = scalar_lea.vmem %s209, 32
        %397 = vst [vmem:[%s396] sm:$0xff] %v386
        %398 = vst [vmem:[%s396 + $0x8] sm:$0xff] %v388
        %399 = vst [vmem:[%s396 + $0x10] sm:$0x1] %v392
        %400 = vst [vmem:[%s396 + $0x18] sm:$0x1] %v394
        %s401 = scalar_lea.vmem %s172, 128 [#allocation4]
        %v402 = vld [vmem:[%s401] sm:$0xff]
        %v403 = vld [vmem:[%s401 + $0x8] sm:$0xff]
        %v404 = vld [vmem:[%s401 + $0x10] sm:$0xff]
        %v405 = vld [vmem:[%s401 + $0x18] sm:$0xff]
        %v406 = vld [vmem:[%s401 + $0x20] sm:$0xff]
        %v407 = vld [vmem:[%s401 + $0x28] sm:$0xff]
        %v408 = vld [vmem:[%s401 + $0x30] sm:$0xff]
        %v409 = vld [vmem:[%s401 + $0x38] sm:$0xff]
        %410 = vmatprep.subr.mxu0 %v403
        %411 = vmatpush1.msra.mxu0 %v402
        %412 = vmatprep.subr.mxu0 %v405
        %413 = vmatpush1.msra.mxu0 %v404
        %414 = vmatprep.subr.mxu0 %v407
        %415 = vmatpush1.msra.mxu0 %v406
        %416 = vmatprep.subr.mxu0 %v409
        %417 = vmatpush1.msra.mxu0 %v408
        %418 = vmatprep.subr.mxu0 0.0
        %419 = vmatpush1.msra.mxu0 0.0
        %420 = vmatprep.subr.mxu0 0.0
        %421 = vmatpush1.msra.mxu0 0.0
        %422 = vmatprep.subr.mxu0 0.0
        %423 = vmatpush1.msra.mxu0 0.0
        %424 = vmatprep.subr.mxu0 0.0
        %425 = vmatpush1.msra.mxu0 0.0
        %426 = vmatprep.subr.mxu0 0.0
        %427 = vmatpush1.msra.mxu0 0.0
        %428 = vmatprep.subr.mxu0 0.0
        %429 = vmatpush1.msra.mxu0 0.0
        %430 = vmatprep.subr.mxu0 0.0
        %431 = vmatpush1.msra.mxu0 0.0
        %432 = vmatprep.subr.mxu0 0.0
        %433 = vmatpush1.msra.mxu0 0.0
        %434 = vmatprep.subr.mxu0 0.0
        %435 = vmatpush1.msra.mxu0 0.0
        %436 = vmatprep.subr.mxu0 0.0
        %437 = vmatpush1.msra.mxu0 0.0
        %438 = vmatprep.subr.mxu0 0.0
        %439 = vmatpush1.msra.mxu0 0.0
        %440 = vmatprep.subr.mxu0 0.0
        %441 = vmatpush1.msra.mxu0 0.0
        %442 = vmatprep.subr.mxu0 0.0
        %443 = vmatpush1.msra.mxu0 0.0
        %444 = vmatprep.subr.mxu0 0.0
        %445 = vmatpush1.msra.mxu0 0.0
        %446 = vmatprep.subr.mxu0 0.0
        %447 = vmatpush1.msra.mxu0 0.0
        %448 = vmatprep.subr.mxu0 0.0
        %449 = vmatpush1.msra.mxu0 0.0
        %450 = vmatprep.subr.mxu0 0.0
        %451 = vmatpush1.msra.mxu0 0.0
        %452 = vmatprep.subr.mxu0 0.0
        %453 = vmatpush1.msra.mxu0 0.0
        %454 = vmatprep.subr.mxu0 0.0
        %455 = vmatpush1.msra.mxu0 0.0
        %456 = vmatprep.subr.mxu0 0.0
        %457 = vmatpush1.msra.mxu0 0.0
        %458 = vmatprep.subr.mxu0 0.0
        %459 = vmatpush1.msra.mxu0 0.0
        %460 = vmatprep.subr.mxu0 0.0
        %461 = vmatpush1.msra.mxu0 0.0
        %462 = vmatprep.subr.mxu0 0.0
        %463 = vmatpush1.msra.mxu0 0.0
        %464 = vmatprep.subr.mxu0 0.0
        %465 = vmatpush1.msra.mxu0 0.0
        %466 = vmatprep.subr.mxu0 0.0
        %467 = vmatpush1.msra.mxu0 0.0
        %468 = vmatprep.subr.mxu0 0.0
        %469 = vmatpush1.msra.mxu0 0.0
        %470 = vmatprep.subr.mxu0 0.0
        %471 = vmatpush1.msra.mxu0 0.0
        %472 = vmatprep.subr.mxu0 0.0
        %473 = vmatpush1.msra.mxu0 0.0
        %474 = vmatprep.mubr.f32.mxu0 0.0
        %475 = vmatmul.mubr.f32.gmra.mrb[0].mxu0 %v224
        %v476 = vpop.f32.mrb[0].mxu0
        %v477 = vadd.f32 0.0, %v476
        %v478 = vpop.f32.mrb[0].mxu0
        %v479 = vadd.f32 0.0, %v478
        %480 = vmatprep.mubr.f32.mxu0 0.0
        %481 = vmatmul.mubr.f32.gmra.mrb[0].mxu0 %v227
        %v482 = vpop.f32.mrb[0].mxu0
        %v483 = vadd.f32 0.0, %v482
        %v484 = vpop.f32.mrb[0].mxu0
        %v485 = vadd.f32 0.0, %v484
        %486 = vdwg.mxu0
        %s487 = scalar_lea.vmem %s209, 64
        %488 = vst [vmem:[%s487] sm:$0xff] %v477
        %489 = vst [vmem:[%s487 + $0x8] sm:$0xff] %v479
        %490 = vst [vmem:[%s487 + $0x10] sm:$0x1] %v483
        %491 = vst [vmem:[%s487 + $0x18] sm:$0x1] %v485
        %s492 = scalar_lea.vmem %s172, 192 [#allocation4]
        %v493 = vld [vmem:[%s492] sm:$0xff]
        %v494 = vld [vmem:[%s492 + $0x8] sm:$0xff]
        %v495 = vld [vmem:[%s492 + $0x10] sm:$0xff]
        %v496 = vld [vmem:[%s492 + $0x18] sm:$0xff]
        %v497 = vld [vmem:[%s492 + $0x20] sm:$0xff]
        %v498 = vld [vmem:[%s492 + $0x28] sm:$0xff]
        %v499 = vld [vmem:[%s492 + $0x30] sm:$0xff]
        %v500 = vld [vmem:[%s492 + $0x38] sm:$0xff]
        %501 = vmatprep.subr.mxu0 %v494
        %502 = vmatpush1.msra.mxu0 %v493
        %503 = vmatprep.subr.mxu0 %v496
        %504 = vmatpush1.msra.mxu0 %v495
        %505 = vmatprep.subr.mxu0 %v498
        %506 = vmatpush1.msra.mxu0 %v497
        %507 = vmatprep.subr.mxu0 %v500
        %508 = vmatpush1.msra.mxu0 %v499
        %509 = vmatprep.subr.mxu0 0.0
        %510 = vmatpush1.msra.mxu0 0.0
        %511 = vmatprep.subr.mxu0 0.0
        %512 = vmatpush1.msra.mxu0 0.0
        %513 = vmatprep.subr.mxu0 0.0
        %514 = vmatpush1.msra.mxu0 0.0
        %515 = vmatprep.subr.mxu0 0.0
        %516 = vmatpush1.msra.mxu0 0.0
        %517 = vmatprep.subr.mxu0 0.0
        %518 = vmatpush1.msra.mxu0 0.0
        %519 = vmatprep.subr.mxu0 0.0
        %520 = vmatpush1.msra.mxu0 0.0
        %521 = vmatprep.subr.mxu0 0.0
        %522 = vmatpush1.msra.mxu0 0.0
        %523 = vmatprep.subr.mxu0 0.0
        %524 = vmatpush1.msra.mxu0 0.0
        %525 = vmatprep.subr.mxu0 0.0
        %526 = vmatpush1.msra.mxu0 0.0
        %527 = vmatprep.subr.mxu0 0.0
        %528 = vmatpush1.msra.mxu0 0.0
        %529 = vmatprep.subr.mxu0 0.0
        %530 = vmatpush1.msra.mxu0 0.0
        %531 = vmatprep.subr.mxu0 0.0
        %532 = vmatpush1.msra.mxu0 0.0
        %533 = vmatprep.subr.mxu0 0.0
        %534 = vmatpush1.msra.mxu0 0.0
        %535 = vmatprep.subr.mxu0 0.0
        %536 = vmatpush1.msra.mxu0 0.0
        %537 = vmatprep.subr.mxu0 0.0
        %538 = vmatpush1.msra.mxu0 0.0
        %539 = vmatprep.subr.mxu0 0.0
        %540 = vmatpush1.msra.mxu0 0.0
        %541 = vmatprep.subr.mxu0 0.0
        %542 = vmatpush1.msra.mxu0 0.0
        %543 = vmatprep.subr.mxu0 0.0
        %544 = vmatpush1.msra.mxu0 0.0
        %545 = vmatprep.subr.mxu0 0.0
        %546 = vmatpush1.msra.mxu0 0.0
        %547 = vmatprep.subr.mxu0 0.0
        %548 = vmatpush1.msra.mxu0 0.0
        %549 = vmatprep.subr.mxu0 0.0
        %550 = vmatpush1.msra.mxu0 0.0
        %551 = vmatprep.subr.mxu0 0.0
        %552 = vmatpush1.msra.mxu0 0.0
        %553 = vmatprep.subr.mxu0 0.0
        %554 = vmatpush1.msra.mxu0 0.0
        %555 = vmatprep.subr.mxu0 0.0
        %556 = vmatpush1.msra.mxu0 0.0
        %557 = vmatprep.subr.mxu0 0.0
        %558 = vmatpush1.msra.mxu0 0.0
        %559 = vmatprep.subr.mxu0 0.0
        %560 = vmatpush1.msra.mxu0 0.0
        %561 = vmatprep.subr.mxu0 0.0
        %562 = vmatpush1.msra.mxu0 0.0
        %563 = vmatprep.subr.mxu0 0.0
        %564 = vmatpush1.msra.mxu0 0.0
        %565 = vmatprep.mubr.f32.mxu0 0.0
        %566 = vmatmul.mubr.f32.gmra.mrb[0].mxu0 %v224
        %v567 = vpop.f32.mrb[0].mxu0
        %v568 = vadd.f32 0.0, %v567
        %v569 = vpop.f32.mrb[0].mxu0
        %v570 = vadd.f32 0.0, %v569
        %571 = vmatprep.mubr.f32.mxu0 0.0
        %572 = vmatmul.mubr.f32.gmra.mrb[0].mxu0 %v227
        %v573 = vpop.f32.mrb[0].mxu0
        %v574 = vadd.f32 0.0, %v573
        %v575 = vpop.f32.mrb[0].mxu0
        %v576 = vadd.f32 0.0, %v575
        %577 = vdwg.mxu0
        %s578 = scalar_lea.vmem %s209, 96
        %579 = vst [vmem:[%s578] sm:$0xff] %v568
        %580 = vst [vmem:[%s578 + $0x8] sm:$0xff] %v570
        %581 = vst [vmem:[%s578 + $0x10] sm:$0x1] %v574
        %582 = vst [vmem:[%s578 + $0x18] sm:$0x1] %v576
        %s583 = smul.u32 4, %s21
        %s584 = smul.u32 2, %s22
        %p585 = scmp.lt.s32.totalorder %s583, 7
        %s586 = scalar_select %p585, %s583, 7
        %p587 = scmp.lt.s32.totalorder %s584, 1
        %s588 = scalar_select %p587, %s584, 1
        %s589 = smul.addr %s586, 4
        %s590 = sadd.s32 %s588, %s589
        %s591 = smul.addr %s590, 8
        %s592 = scalar_lea.vmem %s2, %s591
        // Predicated region
        $region37: #{tpu_custom_call.1} parent=27 // pred_check
          %p593 = pneg %p98
        $region38: #{tpu_custom_call.1} parent=27 // pred_check_branch
          %595 = sbr.rel (%p593) target = $region40
        $region39: #{tpu_custom_call.1} parent=27 // pred_region
          %s596 = smul.u32 4, %s21
          %s597 = smul.u32 2, %s22
        $region40: #{tpu_custom_call.1} parent=27 // pred_fallthru
          _
      $region28: #{tpu_custom_call.1} parent=5 // pred_fallthru
        _
      %p598 = scmp.le.s32.totalorder 2, %s12
      // Predicated region
      $region41: #{tpu_custom_call.1} parent=5 // pred_check
        %p599 = pneg %p598
      $region42: #{tpu_custom_call.1} parent=5 // pred_check_branch
        %601 = sbr.rel (%p599) target = $region44
      $region43: #{tpu_custom_call.1} parent=5 // pred_region
        %s602 = ssub.s32 %s12, 2
        // Predicated region
        $region45: #{tpu_custom_call.1} parent=43 // pred_check
          %p603 = pneg %p104
        $region46: #{tpu_custom_call.1} parent=43 // pred_check_branch
          %605 = sbr.rel (%p603) target = $region48
        $region47: #{tpu_custom_call.1} parent=43 // pred_region
          %s606 = smul.u32 4, %s23
          %s607 = smul.u32 2, %s24
          %p608 = scmp.lt.s32.totalorder %s606, 7
          %s609 = scalar_select %p608, %s606, 7
          %p610 = scmp.lt.s32.totalorder %s607, 1
          %s611 = scalar_select %p610, %s607, 1
          %s612 = smul.addr %s609, 4
          %s613 = sadd.s32 %s611, %s612
          %s614 = smul.addr %s613, 8
          %s615 = scalar_lea.vmem %s2, %s614
        $region48: #{tpu_custom_call.1} parent=43 // pred_fallthru
          _
      $region44: #{tpu_custom_call.1} parent=5 // pred_fallthru
        _
    $region6: #{tpu_custom_call.1} parent=1 // loop_footer
      %s16 = sadd.s32 1, %s12
    $region7: #{tpu_custom_call.1} parent=1 // loop_footer_branch
      %11 = sbr.rel target = $region3
    $region8: #{tpu_custom_call.1} parent=1 // loop_exit
      _
    %616 = vsyncpa [#allocation3], 1
    %s617 = scalar_lea.sflag [#allocation3], 1
    %618 = vsyncpa %s617, 1
    %619 = vsyncpa [#allocation5], 1
    %s620 = scalar_lea.sflag [#allocation5], 1
    %621 = vsyncpa %s620, 1

</llo_original>
